<compile_context>
chip_gen: v7x
topology: tpu7x:2x2x1
jax: 0.10.0
libtpu: 0.0.40
codegen_flags: <defaults>
</compile_context>

<pallas_src>
from typing import Optional

import numpy as np
import jax
import jax.numpy as jnp
from jax.experimental import pallas as pl
from jax.experimental.pallas import tpu as pltpu

_LANE_WIDTHS = (1024, 512, 256, 128)
_TARGET_TILE_BYTES = 4 << 20   # ~4 MiB tile -> <=16 MiB live (in+out, double-buffered)
_VMEM_LIMIT_BYTES = 48 << 20   # headroom for 4 MiB tiles (v5e default scoped is 16 MiB;
                               # 48 MiB fits v7x's 64 MiB physical VMEM)


def _sublane_multiple(dtype) -> int:
    # f32 -> 8, bf16/f16 -> 16, int8/fp8 -> 32 (sub-32-bit dtypes pack along sublanes).
    itemsize = jnp.dtype(dtype).itemsize
    return max(8, 32 // max(1, itemsize))


def _scale_kernel(scale_ref, x_ref, o_ref):
    # Elementwise: out = x * scale, computed in f32 then cast to the output dtype.
    o_ref[...] = (x_ref[...].astype(jnp.float32) * scale_ref[0]).astype(o_ref.dtype)


def _pallas_scale_2d(x2d: jax.Array, scale_f32: jax.Array) -> jax.Array:
    """Tiled elementwise scale over a lane-dense (rows, cols) slab."""
    rows, cols = x2d.shape
    itemsize = x2d.dtype.itemsize
    bytes_per_row = cols * itemsize
    sub = _sublane_multiple(x2d.dtype)

    tile_rows = max(sub, (_TARGET_TILE_BYTES // bytes_per_row) // sub * sub)
    if rows >= 2 * sub:
        # Keep the grid at >= 2 steps so the "parallel" axis shards across both
        # TensorCores on v7x (single-TC v5e/v6e unaffected).
        tile_rows = min(tile_rows, max(sub, (rows // 2) // sub * sub))
    tile_rows = min(tile_rows, rows)

    grid = (pl.cdiv(rows, tile_rows),)   # ragged last block is masked by Pallas
    n = rows * cols
    return pl.pallas_call(
        _scale_kernel,
        out_shape=jax.ShapeDtypeStruct((rows, cols), x2d.dtype),
        grid=grid,
        in_specs=[
            pl.BlockSpec(memory_space=pltpu.MemorySpace.SMEM),   # (1,) f32 coeff
            pl.BlockSpec((tile_rows, cols), lambda i: (i, 0)),   # input tile
        ],
        out_specs=pl.BlockSpec((tile_rows, cols), lambda i: (i, 0)),
        input_output_aliases={1: 0},     # reuse the incoming grad's HBM buffer
        cost_estimate=pl.CostEstimate(
            flops=n, transcendentals=0, bytes_accessed=2 * n * itemsize),
        compiler_params=pltpu.CompilerParams(
            dimension_semantics=("parallel",),
            vmem_limit_bytes=_VMEM_LIMIT_BYTES,
        ),
    )(scale_f32, x2d)


def _apply_scale(x: jax.Array, scale) -> jax.Array:
    """out = x * scale, via the tiled Pallas kernel (no pad/unpad copies)."""
    orig_shape = x.shape
    n = int(np.prod(orig_shape)) if orig_shape else 1
    scale_arr = jnp.asarray(scale, dtype=jnp.float32).reshape((1,))

    width = None
    for w in _LANE_WIDTHS:
        if n >= w and n % w == 0:
            width = w
            break

    if width is not None:
        x2d = x.reshape(-1, width)        # contiguous reshape: no copy
        return _pallas_scale_2d(x2d, scale_arr).reshape(orig_shape)

    # Ragged n (not a multiple of 128): kernel handles the 128-aligned bulk,
    # plain XLA handles only the <128-element tail (avoids 3x-traffic pad/unpad).
    def _xla_scale(v):
        return (v.astype(jnp.float32) * scale_arr[0]).astype(x.dtype)

    flat = x.reshape(-1)
    n_bulk = (n // 128) * 128
    if n_bulk == 0:
        return _xla_scale(flat).reshape(orig_shape)
    bulk = _pallas_scale_2d(flat[:n_bulk].reshape(-1, 128), scale_arr).reshape(-1)
    tail = _xla_scale(flat[n_bulk:])
    return jnp.concatenate([bulk, tail]).reshape(orig_shape)


@jax.custom_vjp
def gradient_reverse(x: jax.Array, coeff: jax.Array) -> jax.Array:
    # Forward is identity (input * 1.0); no kernel, no extra HBM pass.
    return x


def _gr_fwd(x, coeff):
    return x, coeff


def _gr_bwd(coeff, g):
    # Backward: grad_input = -coeff * grad_output, via the Pallas scale kernel.
    # NOTE: an XLA-fused `-coeff * g` would avoid the fusion barrier entirely;
    # the Pallas kernel is kept per the exercise requirement.
    neg_coeff = -jnp.asarray(coeff, dtype=jnp.float32)
    return _apply_scale(g, neg_coeff), jnp.zeros_like(coeff)


gradient_reverse.defvjp(_gr_fwd, _gr_bwd)


class WarmStartGradientReverseLayer:
    """JAX/Pallas port of the PyTorch WarmStartGradientReverseLayer."""

    def __init__(self,
                 alpha: Optional[float] = 1.0,
                 lo: Optional[float] = 0.0,
                 hi: Optional[float] = 1.0,
                 max_iters: Optional[int] = 1000.0,
                 auto_step: Optional[bool] = False):
        self.alpha = alpha
        self.lo = lo
        self.hi = hi
        self.iter_num = 0
        self.max_iters = max_iters
        self.auto_step = auto_step

    def coeff(self) -> float:
        return float(
            2.0 * (self.hi - self.lo)
            / (1.0 + np.exp(-self.alpha * self.iter_num / self.max_iters))
            - (self.hi - self.lo) + self.lo
        )

    def __call__(self, x: jax.Array) -> jax.Array:
        coeff = self.coeff()
        if self.auto_step:
            self.step()
        return gradient_reverse(x, jnp.float32(coeff))

    def step(self):
        self.iter_num += 1


if __name__ == "__main__":
    key = jax.random.PRNGKey(0)
    k0, k1, k2 = jax.random.split(key, 3)

    # NCHW input, small shape (matches the module's typical conv-feature input).
    x = jax.random.normal(k0, (2, 4, 16, 16), dtype=jnp.float32)

    layer = WarmStartGradientReverseLayer(alpha=1.0, lo=0.0, hi=1.0,
                                          max_iters=1000, auto_step=True)

    # Forward: identity (exact), no kernel invocation.
    y = jax.block_until_ready(layer(x))
    assert y.shape == x.shape and y.dtype == x.dtype
    np.testing.assert_array_equal(np.asarray(y), np.asarray(x))

    # Run the Pallas scale kernel directly (same kernel used in backward), f32 path.
    z = jax.block_until_ready(_apply_scale(x, jnp.float32(2.0)))
    np.testing.assert_allclose(np.asarray(z), 2.0 * np.asarray(x),
                               rtol=1e-6, atol=1e-6)

    # bf16 path: exercises dtype-aware sublane rounding and a multi-step grid.
    xb = jax.random.normal(k1, (4, 8, 32, 32), dtype=jnp.bfloat16)
    zb = jax.block_until_ready(_apply_scale(xb, jnp.float32(0.25)))
    ref_b = (np.asarray(xb, dtype=np.float32) * 0.25).astype(np.float32)
    np.testing.assert_allclose(np.asarray(zb, dtype=np.float32), ref_b,
                               rtol=1e-2, atol=1e-2)

    # Ragged path: n not a multiple of 128 -> kernel bulk + XLA tail, no pad copies.
    xr = jax.random.normal(k2, (2, 130), dtype=jnp.float32)
    zr = jax.block_until_ready(_apply_scale(xr, jnp.float32(3.0)))
    np.testing.assert_allclose(np.asarray(zr), 3.0 * np.asarray(xr),
                               rtol=1e-6, atol=1e-6)

    # Backward: gradient reversal through the Pallas kernel.
    coeff_val = 0.5
    g = jax.grad(
        lambda a: jnp.sum(gradient_reverse(a, jnp.float32(coeff_val)))
    )(x)
    g = jax.block_until_ready(g)
    np.testing.assert_allclose(np.asarray(g),
                               -coeff_val * np.ones_like(np.asarray(x)),
                               rtol=1e-6, atol=1e-6)

    print("KERNEL_OK")
</pallas_src>

<mosaic_0001>
module attributes {stable_mosaic.version = 11 : i64} {
  func.func @_scale_kernel(%arg0: i32, %arg1: memref<1xf32, #tpu.memory_space<smem>>, %arg2: memref<2x1024xf32, #tpu.memory_space<vmem>>, %arg3: memref<2x1024xf32, #tpu.memory_space<vmem>>) attributes {dimension_semantics = [#tpu.dimension_semantics<parallel>], iteration_bounds = array<i64: 1>, scalar_prefetch = 0 : i64, scratch_operands = 0 : i64, tpu.core_type = #tpu.core_type<tc>, window_params = [{transform_indices = @transform_0, window_bounds = array<i64: 1>}, {transform_indices = @transform_1, window_bounds = array<i64: 2, 1024>}, {transform_indices = @transform_2, window_bounds = array<i64: 2, 1024>}]} {
    %c0 = arith.constant 0 : index
    %c0_0 = arith.constant 0 : index
    %0 = vector.load %arg2[%c0, %c0_0] : memref<2x1024xf32, #tpu.memory_space<vmem>>, vector<2x1024xf32>
    %c0_1 = arith.constant 0 : index
    %1 = memref.load %arg1[%c0_1] : memref<1xf32, #tpu.memory_space<smem>>
    %2 = vector.broadcast %1 : f32 to vector<2x1024xf32>
    %3 = arith.mulf %0, %2 : vector<2x1024xf32>
    %c0_2 = arith.constant 0 : index
    %c0_3 = arith.constant 0 : index
    %4 = vector.load %arg3[%c0_2, %c0_3] : memref<2x1024xf32, #tpu.memory_space<vmem>>, vector<2x1024xf32>
    tpu.vector_store %arg3[%c0_2, %c0_3], %3 {strides = array<i32>} : memref<2x1024xf32, #tpu.memory_space<vmem>>, vector<2x1024xf32>,
    return
  }
  func.func @transform_0(%arg0: i32) -> i32 {
    %c0_i32 = arith.constant 0 : i32
    %c0_i32_0 = arith.constant 0 : i32
    return %c0_i32 : i32
  }
  func.func @transform_1(%arg0: i32) -> (i32, i32) {
    %c0_i32 = arith.constant 0 : i32
    %c0_i32_0 = arith.constant 0 : i32
    return %arg0, %c0_i32 : i32, i32
  }
  func.func @transform_2(%arg0: i32) -> (i32, i32) {
    %c0_i32 = arith.constant 0 : i32
    %c0_i32_0 = arith.constant 0 : i32
    return %arg0, %c0_i32 : i32, i32
  }
}

</mosaic_0001>

<llo_original>
// kernel: tpu_custom_call.1
$region0: #{tpu_custom_call.1}
  #allocation0 [shape = 'u32[]', space=smem, size = 0x4, offset = 0x4, fixed_abs, tag = 'smem constant byte address 0x4 - core index']
  #allocation1 [shape = 'u32[144,128]{1,0:T(1,128)}', space=vmem, size = 0x12000, scoped, tag = 'internal scratch']
  #allocation2 [shape = 'f32[1]{0:T(128)S(6)}', space=smem, size = 0x200, scoped, tag = 'scoped memory for tpu_custom_call.1']
  %s0 = inlined_call_operand.<no memory space> [shape: f32[1], index: 0, kind: input, shape index: {}]
  %s1 = inlined_call_operand.hbm [shape: f32[2,1024], index: 1, kind: input, shape index: {}, may-alias: {1,2}]
  %s2 = inlined_call_operand.hbm [shape: f32[2,1024], index: 2, kind: output, shape index: {}, may-alias: {1,2}]
  %s3 = sld [smem:[#allocation0]]
  $region22: #{tpu_custom_call.1} parent=0
    _
  %s5 = ssub.s32 1, %s3
  %s6 = scalar_select 0, %s5, %s3
  %7 = sst [smem:[#allocation2]] %s0
  $region1: #{tpu_custom_call.1} parent=0
    #allocation3 [shape = 'u8[8192]{0}', space=vmem, size = 0x2000, scoped, tag = 'input window, operand 1, single buffered']
    #allocation4 [shape = 's32[1]{0}', space=sflag, size = 0x4, scoped, tag = 'scoped memory for tpu_custom_call.1']
    #allocation5 [shape = 's32[1]{0}', space=sflag, size = 0x4, scoped, tag = 'scoped memory for tpu_custom_call.1']
    #allocation6 [shape = 'u8[8192]{0}', space=vmem, size = 0x2000, scoped, tag = 'output window, operand 0, single buffered']
    %8 = vsyncpa [#allocation4], 0
    %9 = vsyncpa [#allocation5], 0
    // Predicated region
    $region2: #{tpu_custom_call.1} parent=1 // pred_check
      _
    $region3: #{tpu_custom_call.1} parent=1 // pred_check_branch
      %11 = sbr.rel (0) target = $region5
    $region4: #{tpu_custom_call.1} parent=1 // pred_region
      _
    $region5: #{tpu_custom_call.1} parent=1 // pred_fallthru
      _
    // Predicated region
    $region6: #{tpu_custom_call.1} parent=1 // pred_check
      _
    $region7: #{tpu_custom_call.1} parent=1 // pred_check_branch
      %13 = sbr.rel (0) target = $region9
    $region8: #{tpu_custom_call.1} parent=1 // pred_region
      %s15 = ssub.s32 256, 256
      %16 = vsyncadd [#allocation4], %s15
      %s18 = sshll.u32 [#allocation3], 4
      %s19 = int_to_ptr.vmem [resolvable:$true] %s18
      %21 = dma.hbm_to_vmem [thread:$0]  %s1, 256, %s19, [#allocation4]
    $region9: #{tpu_custom_call.1} parent=1 // pred_fallthru
      _
    // Predicated region
    $region10: #{tpu_custom_call.1} parent=1 // pred_check
      _
    $region11: #{tpu_custom_call.1} parent=1 // pred_check_branch
      %23 = sbr.rel (0) target = $region13
    $region12: #{tpu_custom_call.1} parent=1 // pred_region
      %24 = dma.done [#allocation4], 256
    $region13: #{tpu_custom_call.1} parent=1 // pred_fallthru
      _
    %v25 = vld [vmem:[#allocation3] sm:$0xff]
    %v26 = vld [vmem:[#allocation3 + $0x8] sm:$0xff]
    %s27 = sld [smem:[#allocation2]]
    %v28 = vstv %s27
    %v29 = vmul.f32 %v25, %v28
    %v30 = vmul.f32 %v26, %v28
    %31 = vst [vmem:[#allocation6] sm:$0xff] %v29
    %32 = vst [vmem:[#allocation6 + $0x8] sm:$0xff] %v30
    // Predicated region
    $region14: #{tpu_custom_call.1} parent=1 // pred_check
      _
    $region15: #{tpu_custom_call.1} parent=1 // pred_check_branch
      %34 = sbr.rel (0) target = $region17
    $region16: #{tpu_custom_call.1} parent=1 // pred_region
      %s36 = ssub.s32 256, 256
      %37 = vsyncadd [#allocation5], %s36
      %s39 = sshll.u32 [#allocation6], 4
      %s40 = int_to_ptr.vmem [resolvable:$true] %s39
      %42 = dma.vmem_to_hbm [thread:$0]  %s40, 256, %s2, [#allocation5]
    $region17: #{tpu_custom_call.1} parent=1 // pred_fallthru
      _
    // Predicated region
    $region18: #{tpu_custom_call.1} parent=1 // pred_check
      _
    $region19: #{tpu_custom_call.1} parent=1 // pred_check_branch
      %44 = sbr.rel (0) target = $region21
    $region20: #{tpu_custom_call.1} parent=1 // pred_region
      %45 = dma.done [#allocation5], 256
    $region21: #{tpu_custom_call.1} parent=1 // pred_fallthru
      _
    %46 = vsyncpa [#allocation4], 1
    %47 = vsyncpa [#allocation5], 1

</llo_original>
